<compile_context>
chip_gen: v7x
topology: tpu7x:2x2x1
jax: 0.10.0
libtpu: 0.0.40
codegen_flags: <defaults>
</compile_context>

<pallas_src>
import jax
import jax.numpy as jnp
from jax.experimental import pallas as pl
from jax.experimental.pallas import tpu as pltpu


def _batch_norm_kernel(x_ref, gamma_ref, beta_ref, out_ref, mean_ref, var_ref):
    # x_ref: (B, TH) block; gamma/beta/mean/var: (1, TH) lane-dense rows.
    x = x_ref[...].astype(jnp.float32)                       # cast in-kernel
    b = x.shape[0]
    inv_b = jnp.float32(1.0 / b)

    # One-pass column stats: sum and sum-of-squares (XLU sublane reductions).
    s = jnp.sum(x, axis=0, keepdims=True)                    # (1, TH)
    sq = jnp.sum(x * x, axis=0, keepdims=True)               # (1, TH)
    mean = s * inv_b
    var = sq * inv_b - mean * mean                           # biased (unbiased=False)

    # Fused affine: out = x * scale + shift  (2 VPU ops per element).
    scale = gamma_ref[...] * jax.lax.rsqrt(var + jnp.float32(0.001))
    shift = beta_ref[...] - mean * scale

    out_ref[...] = (x * scale + shift).astype(out_ref.dtype)
    mean_ref[...] = mean
    var_ref[...] = var


def _pick_tile_h(B, H, vmem_budget_bytes=8 << 20, max_tile=8192):
    """Largest lane tile (multiple of 128, divides H, <= max_tile) whose
    double-buffered f32 in+out working set (~4 * B * TH * 4 bytes) fits the
    budget.  Falls back to the full-extent block for ragged H."""
    if H % 128 != 0:
        # Ragged H: full-extent block (exempt from the (8,128) rule).
        # TODO(synk): for huge ragged H, pad H to a multiple of 128 instead.
        return H
    best = 128
    th = 128
    cap = min(H, max_tile)
    while th <= cap:
        if H % th == 0 and 4 * B * th * 4 <= vmem_budget_bytes:
            best = th
        th += 128
    # TODO(synk): for very large B (even TH=128 over budget), add a second
    # "arbitrary" grid axis over B with a (1, TH) sum/sumsq accumulator
    # (stats pass + apply pass).
    return best


def batch_norm_layer(x, gamma, beta):
    """x: (B, H) float; gamma, beta: (H,) float.

    Returns (normed, beta, gamma, mean, var) mirroring the PyTorch module.
    """
    B, H = x.shape
    out_dtype = jnp.result_type(x.dtype, gamma.dtype, beta.dtype)

    # Cast the tiny parameter rows once in the wrapper (kernel reads f32).
    gamma2 = gamma.reshape(1, H).astype(jnp.float32)
    beta2 = beta.reshape(1, H).astype(jnp.float32)

    TH = _pick_tile_h(B, H)
    grid = (H // TH,)

    normed, mean2, var2 = pl.pallas_call(
        _batch_norm_kernel,
        out_shape=(
            jax.ShapeDtypeStruct((B, H), out_dtype),
            jax.ShapeDtypeStruct((1, H), jnp.float32),
            jax.ShapeDtypeStruct((1, H), jnp.float32),
        ),
        grid=grid,
        in_specs=[
            pl.BlockSpec((B, TH), lambda j: (0, j)),
            pl.BlockSpec((1, TH), lambda j: (0, j)),
            pl.BlockSpec((1, TH), lambda j: (0, j)),
        ],
        out_specs=(
            pl.BlockSpec((B, TH), lambda j: (0, j)),
            pl.BlockSpec((1, TH), lambda j: (0, j)),
            pl.BlockSpec((1, TH), lambda j: (0, j)),
        ),
        compiler_params=pltpu.CompilerParams(
            dimension_semantics=("parallel",),   # shard H tiles across TCs (v7x)
            vmem_limit_bytes=32 * 1024 * 1024,   # explicit; tiles sized to << this
        ),
    )(x, gamma2, beta2)

    return normed, beta, gamma, mean2.reshape(H), var2.reshape(H)


if __name__ == "__main__":
    key = jax.random.PRNGKey(0)
    B, H = 8, 384  # H = 3 * 128 -> exercises a 3-step grid (tiling path)

    x = jax.random.normal(key, (B, H), dtype=jnp.float32)
    # Deterministic parameter init per module __init__: beta=zeros, gamma=ones.
    beta = jnp.zeros((H,), dtype=jnp.float32)
    gamma = jnp.ones((H,), dtype=jnp.float32)

    normed, beta_out, gamma_out, mean, var = batch_norm_layer(x, gamma, beta)
    jax.block_until_ready((normed, beta_out, gamma_out, mean, var))

    # Correctness check against plain-JAX reference.
    ref_mean = jnp.mean(x, axis=0)
    ref_var = jnp.var(x, axis=0)  # biased, matches unbiased=False
    ref_normed = gamma * (x - ref_mean) / jnp.sqrt(ref_var + 0.001) + beta
    assert jnp.allclose(mean, ref_mean, atol=1e-5)
    assert jnp.allclose(var, ref_var, atol=1e-4)
    assert jnp.allclose(normed, ref_normed, atol=1e-4)

    print("KERNEL_OK")
</pallas_src>

<mosaic_0001>
module attributes {stable_mosaic.version = 11 : i64} {
  func.func @_batch_norm_kernel(%arg0: i32, %arg1: memref<8x384xf32, #tpu.memory_space<vmem>>, %arg2: memref<1x384xf32, #tpu.memory_space<vmem>>, %arg3: memref<1x384xf32, #tpu.memory_space<vmem>>, %arg4: memref<8x384xf32, #tpu.memory_space<vmem>>, %arg5: memref<1x384xf32, #tpu.memory_space<vmem>>, %arg6: memref<1x384xf32, #tpu.memory_space<vmem>>) attributes {dimension_semantics = [#tpu.dimension_semantics<parallel>], iteration_bounds = array<i64: 1>, scalar_prefetch = 0 : i64, scratch_operands = 0 : i64, tpu.core_type = #tpu.core_type<tc>, window_params = [{transform_indices = @transform_0, window_bounds = array<i64: 8, 384>}, {transform_indices = @transform_1, window_bounds = array<i64: 1, 384>}, {transform_indices = @transform_2, window_bounds = array<i64: 1, 384>}, {transform_indices = @transform_3, window_bounds = array<i64: 8, 384>}, {transform_indices = @transform_4, window_bounds = array<i64: 1, 384>}, {transform_indices = @transform_5, window_bounds = array<i64: 1, 384>}]} {
    %c0 = arith.constant 0 : index
    %c0_0 = arith.constant 0 : index
    %0 = vector.load %arg1[%c0, %c0_0] : memref<8x384xf32, #tpu.memory_space<vmem>>, vector<8x384xf32>
    %cst = arith.constant dense<0.000000e+00> : vector<384xf32>
    %1 = vector.multi_reduction <add>, %0, %cst [0] : vector<8x384xf32> to vector<384xf32>
    %2 = vector.shape_cast %1 : vector<384xf32> to vector<1x384xf32>
    %3 = arith.mulf %0, %0 : vector<8x384xf32>
    %cst_1 = arith.constant dense<0.000000e+00> : vector<384xf32>
    %4 = vector.multi_reduction <add>, %3, %cst_1 [0] : vector<8x384xf32> to vector<384xf32>
    %5 = vector.shape_cast %4 : vector<384xf32> to vector<1x384xf32>
    %cst_2 = arith.constant 1.250000e-01 : f32
    %6 = vector.broadcast %cst_2 : f32 to vector<1x384xf32>
    %7 = arith.mulf %2, %6 : vector<1x384xf32>
    %cst_3 = arith.constant 1.250000e-01 : f32
    %8 = vector.broadcast %cst_3 : f32 to vector<1x384xf32>
    %9 = arith.mulf %5, %8 : vector<1x384xf32>
    %10 = arith.mulf %7, %7 : vector<1x384xf32>
    %11 = arith.subf %9, %10 : vector<1x384xf32>
    %c0_4 = arith.constant 0 : index
    %c0_5 = arith.constant 0 : index
    %12 = vector.load %arg2[%c0_4, %c0_5] : memref<1x384xf32, #tpu.memory_space<vmem>>, vector<1x384xf32>
    %cst_6 = arith.constant 1.000000e-03 : f32
    %13 = vector.broadcast %cst_6 : f32 to vector<1x384xf32>
    %14 = arith.addf %11, %13 : vector<1x384xf32>
    %15 = math.rsqrt %14 : vector<1x384xf32>
    %16 = arith.mulf %12, %15 : vector<1x384xf32>
    %c0_7 = arith.constant 0 : index
    %c0_8 = arith.constant 0 : index
    %17 = vector.load %arg3[%c0_7, %c0_8] : memref<1x384xf32, #tpu.memory_space<vmem>>, vector<1x384xf32>
    %18 = arith.mulf %7, %16 : vector<1x384xf32>
    %19 = arith.subf %17, %18 : vector<1x384xf32>
    %20 = vector.broadcast %16 : vector<1x384xf32> to vector<8x384xf32>
    %21 = arith.mulf %0, %20 : vector<8x384xf32>
    %22 = vector.broadcast %19 : vector<1x384xf32> to vector<8x384xf32>
    %23 = arith.addf %21, %22 : vector<8x384xf32>
    %c0_9 = arith.constant 0 : index
    %c0_10 = arith.constant 0 : index
    %24 = vector.load %arg4[%c0_9, %c0_10] : memref<8x384xf32, #tpu.memory_space<vmem>>, vector<8x384xf32>
    tpu.vector_store %arg4[%c0_9, %c0_10], %23 {strides = array<i32>} : memref<8x384xf32, #tpu.memory_space<vmem>>, vector<8x384xf32>,
    %c0_11 = arith.constant 0 : index
    %c0_12 = arith.constant 0 : index
    %25 = vector.load %arg5[%c0_11, %c0_12] : memref<1x384xf32, #tpu.memory_space<vmem>>, vector<1x384xf32>
    tpu.vector_store %arg5[%c0_11, %c0_12], %7 {strides = array<i32>} : memref<1x384xf32, #tpu.memory_space<vmem>>, vector<1x384xf32>,
    %c0_13 = arith.constant 0 : index
    %c0_14 = arith.constant 0 : index
    %26 = vector.load %arg6[%c0_13, %c0_14] : memref<1x384xf32, #tpu.memory_space<vmem>>, vector<1x384xf32>
    tpu.vector_store %arg6[%c0_13, %c0_14], %11 {strides = array<i32>} : memref<1x384xf32, #tpu.memory_space<vmem>>, vector<1x384xf32>,
    return
  }
  func.func @transform_0(%arg0: i32) -> (i32, i32) {
    %c0_i32 = arith.constant 0 : i32
    %c0_i32_0 = arith.constant 0 : i32
    return %c0_i32, %arg0 : i32, i32
  }
  func.func @transform_1(%arg0: i32) -> (i32, i32) {
    %c0_i32 = arith.constant 0 : i32
    %c0_i32_0 = arith.constant 0 : i32
    return %c0_i32, %arg0 : i32, i32
  }
  func.func @transform_2(%arg0: i32) -> (i32, i32) {
    %c0_i32 = arith.constant 0 : i32
    %c0_i32_0 = arith.constant 0 : i32
    return %c0_i32, %arg0 : i32, i32
  }
  func.func @transform_3(%arg0: i32) -> (i32, i32) {
    %c0_i32 = arith.constant 0 : i32
    %c0_i32_0 = arith.constant 0 : i32
    return %c0_i32, %arg0 : i32, i32
  }
  func.func @transform_4(%arg0: i32) -> (i32, i32) {
    %c0_i32 = arith.constant 0 : i32
    %c0_i32_0 = arith.constant 0 : i32
    return %c0_i32, %arg0 : i32, i32
  }
  func.func @transform_5(%arg0: i32) -> (i32, i32) {
    %c0_i32 = arith.constant 0 : i32
    %c0_i32_0 = arith.constant 0 : i32
    return %c0_i32, %arg0 : i32, i32
  }
}

</mosaic_0001>

<llo_original>
// kernel: tpu_custom_call.1
$region0: #{tpu_custom_call.1}
  #allocation0 [shape = 'u32[]', space=smem, size = 0x4, offset = 0x4, fixed_abs, tag = 'smem constant byte address 0x4 - core index']
  #allocation1 [shape = 'u32[144,128]{1,0:T(1,128)}', space=vmem, size = 0x12000, scoped, tag = 'internal scratch']
  %s0 = inlined_call_operand.hbm [shape: f32[8,384], index: 0, kind: input, shape index: {}]
  %s1 = inlined_call_operand.vmem [shape: f32[1,384], index: 1, kind: input, shape index: {}]
  %s2 = inlined_call_operand.vmem [shape: f32[1,384], index: 2, kind: input, shape index: {}]
  %s3 = inlined_call_operand.hbm [shape: f32[8,384], index: 3, kind: output, shape index: {0}]
  %s4 = inlined_call_operand.hbm [shape: f32[1,384], index: 4, kind: output, shape index: {1}]
  %s5 = inlined_call_operand.hbm [shape: f32[1,384], index: 5, kind: output, shape index: {2}]
  %6 = xla_tuple %s3, %s4, %s5
  %s7 = sld [smem:[#allocation0]]
  $region42: #{tpu_custom_call.1} parent=0
    _
  %s9 = ssub.s32 1, %s7
  %s10 = scalar_select 0, %s9, %s7
  $region1: #{tpu_custom_call.1} parent=0
    #allocation2 [shape = 'u8[12288]{0}', space=vmem, size = 0x3000, scoped, tag = 'input window, operand 0, single buffered']
    #allocation3 [shape = 's32[1]{0}', space=sflag, size = 0x4, scoped, tag = 'scoped memory for tpu_custom_call.1']
    #allocation4 [shape = 's32[1]{0}', space=sflag, size = 0x4, scoped, tag = 'scoped memory for tpu_custom_call.1']
    #allocation5 [shape = 'u8[12288]{0}', space=vmem, size = 0x3000, scoped, tag = 'output window, operand 0, single buffered']
    #allocation6 [shape = 'u8[1536]{0}', space=vmem, size = 0x800, scoped, tag = 'output window, operand 1, single buffered']
    #allocation7 [shape = 's32[1]{0}', space=sflag, size = 0x4, scoped, tag = 'scoped memory for tpu_custom_call.1']
    #allocation8 [shape = 'u8[1536]{0}', space=vmem, size = 0x800, scoped, tag = 'output window, operand 2, single buffered']
    %11 = vsyncpa [#allocation3], 0
    %12 = vsyncpa [#allocation4], 0
    %13 = vsyncpa [#allocation7], 0
    // Predicated region
    $region2: #{tpu_custom_call.1} parent=1 // pred_check
      _
    $region3: #{tpu_custom_call.1} parent=1 // pred_check_branch
      %15 = sbr.rel (0) target = $region5
    $region4: #{tpu_custom_call.1} parent=1 // pred_region
      %s17 = ssub.s32 384, 384
      %18 = vsyncadd [#allocation3], %s17
      %s20 = sshll.u32 [#allocation2], 4
      %s21 = int_to_ptr.vmem [resolvable:$true] %s20
      %23 = dma.hbm_to_vmem [thread:$0]  %s0, 384, %s21, [#allocation3]
    $region5: #{tpu_custom_call.1} parent=1 // pred_fallthru
      _
    // Predicated region
    $region6: #{tpu_custom_call.1} parent=1 // pred_check
      _
    $region7: #{tpu_custom_call.1} parent=1 // pred_check_branch
      %25 = sbr.rel (0) target = $region9
    $region8: #{tpu_custom_call.1} parent=1 // pred_region
      _
    $region9: #{tpu_custom_call.1} parent=1 // pred_fallthru
      _
    // Predicated region
    $region10: #{tpu_custom_call.1} parent=1 // pred_check
      _
    $region11: #{tpu_custom_call.1} parent=1 // pred_check_branch
      %27 = sbr.rel (0) target = $region13
    $region12: #{tpu_custom_call.1} parent=1 // pred_region
      _
    $region13: #{tpu_custom_call.1} parent=1 // pred_fallthru
      _
    // Predicated region
    $region14: #{tpu_custom_call.1} parent=1 // pred_check
      _
    $region15: #{tpu_custom_call.1} parent=1 // pred_check_branch
      %29 = sbr.rel (0) target = $region17
    $region16: #{tpu_custom_call.1} parent=1 // pred_region
      %30 = dma.done [#allocation3], 384
    $region17: #{tpu_custom_call.1} parent=1 // pred_fallthru
      _
    %v31 = vld [vmem:[#allocation2] sm:$0xff]
    %v32 = vld [vmem:[#allocation2 + $0x8] sm:$0xff]
    %v33 = vld [vmem:[#allocation2 + $0x10] sm:$0xff]
    %v34 = vrot.slane %v31, 4
    %v35 = vadd.f32 %v31, %v34
    %v36 = vrot.slane %v35, 2
    %v37 = vadd.f32 %v35, %v36
    %v38 = vrot.slane %v37, 1
    %v39 = vadd.f32 %v37, %v38
    %v40 = vrot.slane %v32, 4
    %v41 = vadd.f32 %v32, %v40
    %v42 = vrot.slane %v41, 2
    %v43 = vadd.f32 %v41, %v42
    %v44 = vrot.slane %v43, 1
    %v45 = vadd.f32 %v43, %v44
    %v46 = vrot.slane %v33, 4
    %v47 = vadd.f32 %v33, %v46
    %v48 = vrot.slane %v47, 2
    %v49 = vadd.f32 %v47, %v48
    %v50 = vrot.slane %v49, 1
    %v51 = vadd.f32 %v49, %v50
    %v52 = vmul.f32 %v31, %v31
    %v53 = vmul.f32 %v32, %v32
    %v54 = vmul.f32 %v33, %v33
    %v55 = vrot.slane %v52, 4
    %v56 = vadd.f32 %v52, %v55
    %v57 = vrot.slane %v56, 2
    %v58 = vadd.f32 %v56, %v57
    %v59 = vrot.slane %v58, 1
    %v60 = vadd.f32 %v58, %v59
    %v61 = vrot.slane %v53, 4
    %v62 = vadd.f32 %v53, %v61
    %v63 = vrot.slane %v62, 2
    %v64 = vadd.f32 %v62, %v63
    %v65 = vrot.slane %v64, 1
    %v66 = vadd.f32 %v64, %v65
    %v67 = vrot.slane %v54, 4
    %v68 = vadd.f32 %v54, %v67
    %v69 = vrot.slane %v68, 2
    %v70 = vadd.f32 %v68, %v69
    %v71 = vrot.slane %v70, 1
    %v72 = vadd.f32 %v70, %v71
    %v73 = vmul.f32 %v39, 0.125
    %v74 = vmul.f32 %v45, 0.125
    %v75 = vmul.f32 %v51, 0.125
    %v76 = vmul.f32 %v60, 0.125
    %v77 = vmul.f32 %v66, 0.125
    %v78 = vmul.f32 %v72, 0.125
    %v79 = vmul.f32 %v73, %v73
    %v80 = vmul.f32 %v74, %v74
    %v81 = vmul.f32 %v75, %v75
    %v82 = vsub.f32 %v76, %v79
    %v83 = vsub.f32 %v77, %v80
    %v84 = vsub.f32 %v78, %v81
    %v85 = vld [vmem:[%s1] sm:$0x7]
    %v86 = vadd.f32 %v82, 0.001
    %v87 = vadd.f32 %v83, 0.001
    %v88 = vadd.f32 %v84, 0.001
    %v89 = vrsqrt.pop %v86
    %v90 = vrsqrt.pop %v87
    %v91 = vrsqrt.pop %v88
    %v95 = vcombine.low %v89, %v90
    %v97 = vunpack.c.l.s4 1966171168
    %v98 = vunpack.c.0.s8 %v97
    %v99 = vlaneseq
    %v100 = vshrl.u32 %v99, 7
    %v101 = vsub.s32 %v98, %v100
    %v102 = vrot.slane %v95, %v101
    %v104 = vunpack.c.l.s4 1966171168
    %v105 = vunpack.c.0.s8 %v104
    %v106 = vlaneseq
    %v107 = vshrl.u32 %v106, 7
    %v108 = vsub.s32 %v105, %v107
    %v109 = vrot.slane %v91, %v108
    %v110 = vcombine.low %v102, %v109
    %v112 = vunpack.c.l.s4 1966171168
    %v113 = vunpack.c.0.s8 %v112
    %v114 = vlaneseq
    %v115 = vshrl.u32 %v114, 7
    %v116 = vsub.s32 %v113, %v115
    %v117 = vrot.slane %v110, %v116
    %v119 = vmul.f32 %v85, %v117
    %v120 = vld [vmem:[%s2] sm:$0x7]
    %v122 = vlaneseq
    %v123 = vshrl.u32 %v122, 7
    %v124 = vsub.s32 0, %v123
    %v125 = vrot.slane %v119, %v124
    %v126 = vlaneseq
    %v127 = vshrl.u32 %v126, 7
    %v128 = vsub.s32 1, %v127
    %v129 = vrot.slane %v119, %v128
    %v130 = vlaneseq
    %v131 = vshrl.u32 %v130, 7
    %v132 = vsub.s32 2, %v131
    %v133 = vrot.slane %v119, %v132
    %v137 = vmul.f32 %v73, %v125
    %v138 = vmul.f32 %v74, %v129
    %v139 = vmul.f32 %v75, %v133
    %v143 = vcombine.low %v137, %v138
    %v145 = vunpack.c.l.s4 1966171168
    %v146 = vunpack.c.0.s8 %v145
    %v147 = vlaneseq
    %v148 = vshrl.u32 %v147, 7
    %v149 = vsub.s32 %v146, %v148
    %v150 = vrot.slane %v143, %v149
    %v152 = vunpack.c.l.s4 1966171168
    %v153 = vunpack.c.0.s8 %v152
    %v154 = vlaneseq
    %v155 = vshrl.u32 %v154, 7
    %v156 = vsub.s32 %v153, %v155
    %v157 = vrot.slane %v139, %v156
    %v158 = vcombine.low %v150, %v157
    %v160 = vunpack.c.l.s4 1966171168
    %v161 = vunpack.c.0.s8 %v160
    %v162 = vlaneseq
    %v163 = vshrl.u32 %v162, 7
    %v164 = vsub.s32 %v161, %v163
    %v165 = vrot.slane %v158, %v164
    %v167 = vsub.f32 %v120, %v165
    %v168 = vmul.f32 %v31, %v125
    %v169 = vmul.f32 %v32, %v129
    %v170 = vmul.f32 %v33, %v133
    %v172 = vlaneseq
    %v173 = vshrl.u32 %v172, 7
    %v174 = vsub.s32 0, %v173
    %v175 = vrot.slane %v167, %v174
    %v176 = vlaneseq
    %v177 = vshrl.u32 %v176, 7
    %v178 = vsub.s32 1, %v177
    %v179 = vrot.slane %v167, %v178
    %v180 = vlaneseq
    %v181 = vshrl.u32 %v180, 7
    %v182 = vsub.s32 2, %v181
    %v183 = vrot.slane %v167, %v182
    %v187 = vadd.f32 %v168, %v175
    %v188 = vadd.f32 %v169, %v179
    %v189 = vadd.f32 %v170, %v183
    %190 = vst [vmem:[#allocation5] sm:$0xff] %v187
    %191 = vst [vmem:[#allocation5 + $0x8] sm:$0xff] %v188
    %192 = vst [vmem:[#allocation5 + $0x10] sm:$0xff] %v189
    %v196 = vcombine.low %v73, %v74
    %v198 = vunpack.c.l.s4 1966171168
    %v199 = vunpack.c.0.s8 %v198
    %v200 = vlaneseq
    %v201 = vshrl.u32 %v200, 7
    %v202 = vsub.s32 %v199, %v201
    %v203 = vrot.slane %v196, %v202
    %v205 = vunpack.c.l.s4 1966171168
    %v206 = vunpack.c.0.s8 %v205
    %v207 = vlaneseq
    %v208 = vshrl.u32 %v207, 7
    %v209 = vsub.s32 %v206, %v208
    %v210 = vrot.slane %v75, %v209
    %v211 = vcombine.low %v203, %v210
    %v213 = vunpack.c.l.s4 1966171168
    %v214 = vunpack.c.0.s8 %v213
    %v215 = vlaneseq
    %v216 = vshrl.u32 %v215, 7
    %v217 = vsub.s32 %v214, %v216
    %v218 = vrot.slane %v211, %v217
    %v220 = vlaneseq
    %vm221 = vcmp.ge.s32.totalorder %v220, 0
    %vm222 = vcmp.lt.s32.totalorder %v220, 384
    %vm223 = vmand %vm221, %vm222
    %224 = vst.msk [vmem:[#allocation6] sm:$0x7] %vm223, %v218
    %v228 = vcombine.low %v82, %v83
    %v230 = vunpack.c.l.s4 1966171168
    %v231 = vunpack.c.0.s8 %v230
    %v232 = vlaneseq
    %v233 = vshrl.u32 %v232, 7
    %v234 = vsub.s32 %v231, %v233
    %v235 = vrot.slane %v228, %v234
    %v237 = vunpack.c.l.s4 1966171168
    %v238 = vunpack.c.0.s8 %v237
    %v239 = vlaneseq
    %v240 = vshrl.u32 %v239, 7
    %v241 = vsub.s32 %v238, %v240
    %v242 = vrot.slane %v84, %v241
    %v243 = vcombine.low %v235, %v242
    %v245 = vunpack.c.l.s4 1966171168
    %v246 = vunpack.c.0.s8 %v245
    %v247 = vlaneseq
    %v248 = vshrl.u32 %v247, 7
    %v249 = vsub.s32 %v246, %v248
    %v250 = vrot.slane %v243, %v249
    %252 = vst.msk [vmem:[#allocation8] sm:$0x7] %vm223, %v250
    // Predicated region
    $region18: #{tpu_custom_call.1} parent=1 // pred_check
      _
    $region19: #{tpu_custom_call.1} parent=1 // pred_check_branch
      %254 = sbr.rel (0) target = $region21
    $region20: #{tpu_custom_call.1} parent=1 // pred_region
      %s256 = ssub.s32 384, 384
      %257 = vsyncadd [#allocation4], %s256
      %s259 = sshll.u32 [#allocation5], 4
      %s260 = int_to_ptr.vmem [resolvable:$true] %s259
      %262 = dma.vmem_to_hbm [thread:$0]  %s260, 384, %s3, [#allocation4]
    $region21: #{tpu_custom_call.1} parent=1 // pred_fallthru
      _
    // Predicated region
    $region22: #{tpu_custom_call.1} parent=1 // pred_check
      _
    $region23: #{tpu_custom_call.1} parent=1 // pred_check_branch
      %264 = sbr.rel (0) target = $region25
    $region24: #{tpu_custom_call.1} parent=1 // pred_region
      %s266 = ssub.s32 48, 48
      %267 = vsyncadd [#allocation7], %s266
      %s269 = sshll.u32 [#allocation6], 4
      %s270 = int_to_ptr.vmem [resolvable:$true] %s269
      %272 = dma.vmem_to_hbm [thread:$0]  %s270, 48, %s4, [#allocation7]
    $region25: #{tpu_custom_call.1} parent=1 // pred_fallthru
      _
    // Predicated region
    $region26: #{tpu_custom_call.1} parent=1 // pred_check
      _
    $region27: #{tpu_custom_call.1} parent=1 // pred_check_branch
      %274 = sbr.rel (0) target = $region29
    $region28: #{tpu_custom_call.1} parent=1 // pred_region
      %s276 = ssub.s32 48, 48
      %277 = vsyncadd [#allocation7], %s276
      %s279 = sshll.u32 [#allocation8], 4
      %s280 = int_to_ptr.vmem [resolvable:$true] %s279
      %282 = dma.vmem_to_hbm [thread:$0]  %s280, 48, %s5, [#allocation7]
    $region29: #{tpu_custom_call.1} parent=1 // pred_fallthru
      _
    // Predicated region
    $region30: #{tpu_custom_call.1} parent=1 // pred_check
      _
    $region31: #{tpu_custom_call.1} parent=1 // pred_check_branch
      %284 = sbr.rel (0) target = $region33
    $region32: #{tpu_custom_call.1} parent=1 // pred_region
      %285 = dma.done [#allocation4], 384
    $region33: #{tpu_custom_call.1} parent=1 // pred_fallthru
      _
    // Predicated region
    $region34: #{tpu_custom_call.1} parent=1 // pred_check
      _
    $region35: #{tpu_custom_call.1} parent=1 // pred_check_branch
      %287 = sbr.rel (0) target = $region37
    $region36: #{tpu_custom_call.1} parent=1 // pred_region
      %288 = dma.done [#allocation7], 48
    $region37: #{tpu_custom_call.1} parent=1 // pred_fallthru
      _
    // Predicated region
    $region38: #{tpu_custom_call.1} parent=1 // pred_check
      _
    $region39: #{tpu_custom_call.1} parent=1 // pred_check_branch
      %290 = sbr.rel (0) target = $region41
    $region40: #{tpu_custom_call.1} parent=1 // pred_region
      %291 = dma.done [#allocation7], 48
    $region41: #{tpu_custom_call.1} parent=1 // pred_fallthru
      _
    %292 = vsyncpa [#allocation3], 1
    %293 = vsyncpa [#allocation4], 1
    %294 = vsyncpa [#allocation7], 1

</llo_original>
